<compile_context>
chip_gen: v7x
topology: tpu7x:2x2x1
jax: 0.10.0
libtpu: 0.0.40
codegen_flags: <defaults>
</compile_context>

<pallas_src>
import jax
import jax.numpy as jnp
from jax.experimental import pallas as pl
from jax.experimental.pallas import tpu as pltpu


def _round_up(x, m):
    return (x + m - 1) // m * m


# ----------------------------------------------------------------------------
# Kernel 1: stacked ESM projection  out[t] = x[t] @ w[t] + b[t]
#   grid axis t in {pep, prot}, marked "parallel" (megacore-shardable on v7x).
#   Single-shot matmul: no K grid, no accumulator scratch.  bf16 in / f32 acc.
# ----------------------------------------------------------------------------
def _dual_linear_kernel(x_ref, w_ref, b_ref, o_ref):
    # x_ref: (1, Np, K) bf16, w_ref: (1, K, H) bf16, b_ref: (1, 1, H) f32
    o_ref[0] = (jnp.dot(x_ref[0], w_ref[0], preferred_element_type=jnp.float32)
                + b_ref[0])


def pallas_dual_linear(x_stack, w_stack, b_stack):
    """x_stack: [2, Np, K] bf16, w_stack: [2, K, H] bf16, b_stack: [2, 1, H] f32."""
    T, Np, K = x_stack.shape
    H = w_stack.shape[-1]
    return pl.pallas_call(
        _dual_linear_kernel,
        out_shape=jax.ShapeDtypeStruct((T, Np, H), jnp.float32),
        grid_spec=pltpu.PrefetchScalarGridSpec(
            num_scalar_prefetch=0,
            grid=(T,),
            in_specs=[
                pl.BlockSpec((1, Np, K), lambda t: (t, 0, 0)),
                pl.BlockSpec((1, K, H), lambda t: (t, 0, 0)),
                pl.BlockSpec((1, 1, H), lambda t: (t, 0, 0)),
            ],
            out_specs=pl.BlockSpec((1, Np, H), lambda t: (t, 0, 0)),
        ),
        compiler_params=pltpu.CompilerParams(
            dimension_semantics=("parallel",)),
    )(x_stack, w_stack, b_stack)


# ----------------------------------------------------------------------------
# Kernel 2: fully fused 2-layer hetero GNN (both edge directions).
#   conv(dst) = act( A_norm @ (x_src @ W_nbr) + x_dst @ W_self + b )
# All operands stay resident in VMEM for the whole kernel; intermediates
# h_pep / h_prot never touch HBM.
# ----------------------------------------------------------------------------
def _fused_gnn_kernel(adj_pp_ref, adj_pr_ref, x_pep_ref, x_prot_ref,
                      wn1p_ref, ws1p_ref, b1p_ref,
                      wn1q_ref, ws1q_ref, b1q_ref,
                      wn2p_ref, ws2p_ref, b2p_ref,
                      wn2q_ref, ws2q_ref, b2q_ref,
                      o_pep_ref, o_prot_ref):
    def conv(adj, xs, xd, wn, ws, b, relu):
        # Reassociated: project to f_out first, then the dense-adj product.
        out = (jnp.dot(adj,
                       jnp.dot(xs, wn, preferred_element_type=jnp.float32),
                       preferred_element_type=jnp.float32)
               + jnp.dot(xd, ws, preferred_element_type=jnp.float32)
               + b)
        return jnp.maximum(out, 0.0) if relu else out

    adj_pp = adj_pp_ref[...]   # [n_prot, n_pep]  (pep -> prot)
    adj_pr = adj_pr_ref[...]   # [n_pep, n_prot]  (prot -> pep)
    x_pep = x_pep_ref[...]
    x_prot = x_prot_ref[...]

    # Layer 1 (+ relu, backbone != 'GAT')
    h_prot = conv(adj_pp, x_pep, x_prot,
                  wn1p_ref[...], ws1p_ref[...], b1p_ref[...], True)
    h_pep = conv(adj_pr, x_prot, x_pep,
                 wn1q_ref[...], ws1q_ref[...], b1q_ref[...], True)
    # Layer 2 (no activation)
    o_prot_ref[...] = conv(adj_pp, h_pep, h_prot,
                           wn2p_ref[...], ws2p_ref[...], b2p_ref[...], False)
    o_pep_ref[...] = conv(adj_pr, h_prot, h_pep,
                          wn2q_ref[...], ws2q_ref[...], b2q_ref[...], False)


def pallas_fused_gnn(adj_p2pr, adj_pr2p, x_pep, x_prot, params):
    n_pep, n_prot = x_pep.shape[0], x_prot.shape[0]
    hidden = params["pep__bind__prot_l1_wn"].shape[1]
    return pl.pallas_call(
        _fused_gnn_kernel,
        out_shape=(jax.ShapeDtypeStruct((n_pep, hidden), jnp.float32),
                   jax.ShapeDtypeStruct((n_prot, hidden), jnp.float32)),
    )(adj_p2pr, adj_pr2p, x_pep, x_prot,
      params["pep__bind__prot_l1_wn"], params["pep__bind__prot_l1_ws"],
      params["pep__bind__prot_l1_b"],
      params["prot__rev_bind__pep_l1_wn"], params["prot__rev_bind__pep_l1_ws"],
      params["prot__rev_bind__pep_l1_b"],
      params["pep__bind__prot_l2_wn"], params["pep__bind__prot_l2_ws"],
      params["pep__bind__prot_l2_b"],
      params["prot__rev_bind__pep_l2_wn"], params["prot__rev_bind__pep_l2_ws"],
      params["prot__rev_bind__pep_l2_b"])


# ----------------------------------------------------------------------------
# Glue: dense mean-normalized adjacency from an edge_index.
# ----------------------------------------------------------------------------
def build_mean_adj(edge_index, n_src, n_dst):
    src, dst = edge_index[0], edge_index[1]
    A = jnp.zeros((n_dst, n_src), jnp.float32).at[dst, src].add(1.0)
    deg = jnp.maximum(A.sum(axis=1, keepdims=True), 1.0)
    return A / deg


# ----------------------------------------------------------------------------
# Parameter init (deterministic, synthetic).
# ----------------------------------------------------------------------------
def init_params(key, hidden, n_pep, n_prot, esm_dim=1280):
    keys = jax.random.split(key, 16)
    s = 0.05

    def W(k, shape):
        return jax.random.normal(k, shape, jnp.float32) * s

    p = {
        # torch Linear(1280, hidden): transposed weight [1280, hidden], bf16 storage
        "pep_lin_w": W(keys[0], (esm_dim, hidden)).astype(jnp.bfloat16),
        "pep_lin_b": W(keys[1], (hidden,)),
        "prot_lin_w": W(keys[2], (esm_dim, hidden)).astype(jnp.bfloat16),
        "prot_lin_b": W(keys[3], (hidden,)),
        "pep_emb": W(keys[4], (n_pep, hidden)),
        "prot_emb": W(keys[5], (n_prot, hidden)),
    }
    # to_hetero(GNN): one (gnn1, gnn2) parameter set per edge type.
    # feat_src == 'esm_emb'  ->  gnn1: 2*hidden -> hidden ; gnn2: hidden -> hidden
    f_in1, f_out = 2 * hidden, hidden
    ki = 6
    for et in ("pep__bind__prot", "prot__rev_bind__pep"):
        for layer, f_in in (("l1", f_in1), ("l2", f_out)):
            p[f"{et}_{layer}_wn"] = W(keys[ki], (f_in, f_out)); ki += 1
            p[f"{et}_{layer}_ws"] = W(keys[ki], (f_in, f_out)); ki += 1
            p[f"{et}_{layer}_b"] = jnp.zeros((1, f_out), jnp.float32)
    return p


# ----------------------------------------------------------------------------
# PPIHetero forward (feat_src == 'esm_emb', gnn_method == 'GCN' -> relu).
# ----------------------------------------------------------------------------
def ppi_hetero_forward(params, data):
    n_pep = data["pep_x"].shape[0]
    n_prot = data["prot_x"].shape[0]
    esm_dim = data["pep_x"].shape[1]
    hidden = params["pep_emb"].shape[1]

    # --- ESM projection: both node types in ONE pallas_call (parallel grid) ---
    n_pad = _round_up(max(n_pep, n_prot), 16)   # 16 = bf16 sublane packing
    x_stack = jnp.zeros((2, n_pad, esm_dim), jnp.bfloat16)
    x_stack = x_stack.at[0, :n_pep].set(data["pep_x"].astype(jnp.bfloat16))
    x_stack = x_stack.at[1, :n_prot].set(data["prot_x"].astype(jnp.bfloat16))
    w_stack = jnp.stack([params["pep_lin_w"], params["prot_lin_w"]])
    b_stack = jnp.stack([params["pep_lin_b"].reshape(1, hidden),
                         params["prot_lin_b"].reshape(1, hidden)])
    proj = pallas_dual_linear(x_stack, w_stack, b_stack)

    # --- node feature construction (projection || learned embedding) ---------
    x_pep = jnp.concatenate(
        [proj[0, :n_pep], jnp.take(params["pep_emb"], data["pep_node_id"], axis=0)],
        axis=1)
    x_prot = jnp.concatenate(
        [proj[1, :n_prot], jnp.take(params["prot_emb"], data["prot_node_id"], axis=0)],
        axis=1)

    # ('pep','bind','prot') edges and their reverse ('prot','rev_bind','pep')
    adj_p2pr = build_mean_adj(data["edge_index_bind"], n_pep, n_prot)        # [n_prot, n_pep]
    adj_pr2p = build_mean_adj(data["edge_index_bind"][::-1], n_prot, n_pep)  # [n_pep, n_prot]

    # --- fused 2-layer hetero GNN (single pallas_call) ------------------------
    o_pep, o_prot = pallas_fused_gnn(adj_p2pr, adj_pr2p, x_pep, x_prot, params)

    # --- classifier: 16 scalars -> plain JAX (a kernel here is pure overhead) -
    eli = data["edge_label_index"]
    return jnp.sum(jnp.take(o_pep, eli[0], axis=0)
                   * jnp.take(o_prot, eli[1], axis=0), axis=-1)


# ----------------------------------------------------------------------------
# Pure-JAX reference for sanity checking (same bf16 projection numerics).
# ----------------------------------------------------------------------------
def reference_forward(params, data):
    def lin(x, w, b):
        return jnp.dot(x.astype(jnp.bfloat16), w,
                       preferred_element_type=jnp.float32) + b

    x_pep = jnp.concatenate(
        [lin(data["pep_x"], params["pep_lin_w"], params["pep_lin_b"]),
         params["pep_emb"][data["pep_node_id"]]], axis=1)
    x_prot = jnp.concatenate(
        [lin(data["prot_x"], params["prot_lin_w"], params["prot_lin_b"]),
         params["prot_emb"][data["prot_node_id"]]], axis=1)
    n_pep, n_prot = x_pep.shape[0], x_prot.shape[0]
    adj_p2pr = build_mean_adj(data["edge_index_bind"], n_pep, n_prot)
    adj_pr2p = build_mean_adj(data["edge_index_bind"][::-1], n_prot, n_pep)

    def conv(adj, xs, xd, wn, ws, b, relu):
        out = adj @ (xs @ wn) + xd @ ws + b
        return jnp.maximum(out, 0.0) if relu else out

    h_prot = conv(adj_p2pr, x_pep, x_prot, params["pep__bind__prot_l1_wn"],
                  params["pep__bind__prot_l1_ws"], params["pep__bind__prot_l1_b"], True)
    h_pep = conv(adj_pr2p, x_prot, x_pep, params["prot__rev_bind__pep_l1_wn"],
                 params["prot__rev_bind__pep_l1_ws"], params["prot__rev_bind__pep_l1_b"], True)
    o_prot = conv(adj_p2pr, h_pep, h_prot, params["pep__bind__prot_l2_wn"],
                  params["pep__bind__prot_l2_ws"], params["pep__bind__prot_l2_b"], False)
    o_pep = conv(adj_pr2p, h_prot, h_pep, params["prot__rev_bind__pep_l2_wn"],
                 params["prot__rev_bind__pep_l2_ws"], params["prot__rev_bind__pep_l2_b"], False)
    eli = data["edge_label_index"]
    return jnp.sum(o_pep[eli[0]] * o_prot[eli[1]], axis=-1)


if __name__ == "__main__":
    HIDDEN = 32
    N_PEP, N_PROT = 8, 12
    ESM_DIM = 1280
    E_MP, E_LABEL = 20, 16

    root = jax.random.PRNGKey(0)
    k_param, k_xp, k_xq, k_e0, k_e1, k_l0, k_l1 = jax.random.split(root, 7)

    params = init_params(k_param, HIDDEN, N_PEP, N_PROT, ESM_DIM)

    data = {
        "pep_x": jax.random.normal(k_xp, (N_PEP, ESM_DIM), jnp.float32),
        "prot_x": jax.random.normal(k_xq, (N_PROT, ESM_DIM), jnp.float32),
        "pep_node_id": jnp.arange(N_PEP, dtype=jnp.int32),
        "prot_node_id": jnp.arange(N_PROT, dtype=jnp.int32),
        # ('pep','bind','prot') message-passing edges: row0 = pep idx, row1 = prot idx
        "edge_index_bind": jnp.stack([
            jax.random.randint(k_e0, (E_MP,), 0, N_PEP, jnp.int32),
            jax.random.randint(k_e1, (E_MP,), 0, N_PROT, jnp.int32)]),
        # supervision edges for the classifier
        "edge_label_index": jnp.stack([
            jax.random.randint(k_l0, (E_LABEL,), 0, N_PEP, jnp.int32),
            jax.random.randint(k_l1, (E_LABEL,), 0, N_PROT, jnp.int32)]),
    }

    pred = jax.block_until_ready(ppi_hetero_forward(params, data))
    ref = jax.block_until_ready(reference_forward(params, data))

    assert pred.shape == (E_LABEL,), pred.shape
    assert jnp.allclose(pred, ref, atol=2e-3, rtol=2e-3), (pred, ref)
    print("KERNEL_OK")
</pallas_src>

<mosaic_0001>
module attributes {stable_mosaic.version = 11 : i64} {
  func.func @_dual_linear_kernel(%arg0: i32, %arg1: memref<1x16x1280xbf16, #tpu.memory_space<vmem>>, %arg2: memref<1x1280x32xbf16, #tpu.memory_space<vmem>>, %arg3: memref<1x1x32xf32, #tpu.memory_space<vmem>>, %arg4: memref<1x16x32xf32, #tpu.memory_space<vmem>>) attributes {dimension_semantics = [#tpu.dimension_semantics<parallel>], iteration_bounds = array<i64: 2>, scalar_prefetch = 0 : i64, scratch_operands = 0 : i64, tpu.core_type = #tpu.core_type<tc>, window_params = [{transform_indices = @transform_0, window_bounds = array<i64: 1, 16, 1280>}, {transform_indices = @transform_1, window_bounds = array<i64: 1, 1280, 32>}, {transform_indices = @transform_2, window_bounds = array<i64: 1, 1, 32>}, {transform_indices = @transform_3, window_bounds = array<i64: 1, 16, 32>}]} {
    %c0 = arith.constant 0 : index
    %c0_0 = arith.constant 0 : index
    %c0_1 = arith.constant 0 : index
    %0 = vector.load %arg1[%c0, %c0_0, %c0_1] : memref<1x16x1280xbf16, #tpu.memory_space<vmem>>, vector<1x16x1280xbf16>
    %1 = vector.shape_cast %0 : vector<1x16x1280xbf16> to vector<16x1280xbf16>
    %c0_2 = arith.constant 0 : index
    %c0_3 = arith.constant 0 : index
    %c0_4 = arith.constant 0 : index
    %2 = vector.load %arg2[%c0_2, %c0_3, %c0_4] : memref<1x1280x32xbf16, #tpu.memory_space<vmem>>, vector<1x1280x32xbf16>
    %3 = vector.shape_cast %2 : vector<1x1280x32xbf16> to vector<1280x32xbf16>
    %cst = arith.constant dense<0.000000e+00> : vector<16x32xf32>
    %4 = tpu.matmul %1, %3, %cst {dimension_numbers = #tpu.dot_dimension_numbers<[1], [0], [0], [1], [0, 0, 1, 1], [], []>} : vector<16x1280xbf16>, vector<1280x32xbf16>, vector<16x32xf32> -> vector<16x32xf32>
    %c0_5 = arith.constant 0 : index
    %c0_6 = arith.constant 0 : index
    %c0_7 = arith.constant 0 : index
    %5 = vector.load %arg3[%c0_5, %c0_6, %c0_7] : memref<1x1x32xf32, #tpu.memory_space<vmem>>, vector<1x1x32xf32>
    %6 = vector.shape_cast %5 : vector<1x1x32xf32> to vector<1x32xf32>
    %7 = vector.broadcast %6 : vector<1x32xf32> to vector<16x32xf32>
    %8 = arith.addf %4, %7 : vector<16x32xf32>
    %c0_8 = arith.constant 0 : index
    %c0_9 = arith.constant 0 : index
    %c0_10 = arith.constant 0 : index
    %9 = vector.load %arg4[%c0_8, %c0_9, %c0_10] : memref<1x16x32xf32, #tpu.memory_space<vmem>>, vector<1x16x32xf32>
    %10 = vector.shape_cast %9 : vector<1x16x32xf32> to vector<16x32xf32>
    %11 = vector.shape_cast %8 : vector<16x32xf32> to vector<1x16x32xf32>
    tpu.vector_store %arg4[%c0_8, %c0_9, %c0_10], %11 {strides = array<i32>} : memref<1x16x32xf32, #tpu.memory_space<vmem>>, vector<1x16x32xf32>,
    return
  }
  func.func @transform_0(%arg0: i32) -> (i32, i32, i32) {
    %c0_i32 = arith.constant 0 : i32
    %c0_i32_0 = arith.constant 0 : i32
    %c0_i32_1 = arith.constant 0 : i32
    return %arg0, %c0_i32, %c0_i32_0 : i32, i32, i32
  }
  func.func @transform_1(%arg0: i32) -> (i32, i32, i32) {
    %c0_i32 = arith.constant 0 : i32
    %c0_i32_0 = arith.constant 0 : i32
    %c0_i32_1 = arith.constant 0 : i32
    return %arg0, %c0_i32, %c0_i32_0 : i32, i32, i32
  }
  func.func @transform_2(%arg0: i32) -> (i32, i32, i32) {
    %c0_i32 = arith.constant 0 : i32
    %c0_i32_0 = arith.constant 0 : i32
    %c0_i32_1 = arith.constant 0 : i32
    return %arg0, %c0_i32, %c0_i32_0 : i32, i32, i32
  }
  func.func @transform_3(%arg0: i32) -> (i32, i32, i32) {
    %c0_i32 = arith.constant 0 : i32
    %c0_i32_0 = arith.constant 0 : i32
    %c0_i32_1 = arith.constant 0 : i32
    return %arg0, %c0_i32, %c0_i32_0 : i32, i32, i32
  }
}

</mosaic_0001>

<llo_original>
// kernel: tpu_custom_call.1
$region0: #{tpu_custom_call.1}
  #allocation0 [shape = 'u32[]', space=smem, size = 0x4, offset = 0x4, fixed_abs, tag = 'smem constant byte address 0x4 - core index']
  #allocation1 [shape = 'u32[144,128]{1,0:T(1,128)}', space=vmem, size = 0x12000, scoped, tag = 'internal scratch']
  %s0 = inlined_call_operand.vmem [shape: bf16[2,16,1280], index: 0, kind: input, shape index: {}]
  %s1 = inlined_call_operand.vmem [shape: bf16[2,1280,32], index: 1, kind: input, shape index: {}]
  %s2 = inlined_call_operand.vmem [shape: f32[2,1,32], index: 2, kind: input, shape index: {}]
  %s3 = inlined_call_operand.hbm [shape: f32[2,16,32], index: 3, kind: output, shape index: {}]
  %s4 = sld [smem:[#allocation0]]
  $region45: #{tpu_custom_call.1} parent=0
    _
  %s6 = ssub.s32 1, %s4
  %s7 = scalar_select 0, %s6, %s4
  $region1: #{tpu_custom_call.1} parent=0
    #allocation2 [shape = 'u8[16384]{0}', space=vmem, size = 0x4000, scoped, tag = 'output window, operand 0']
    #allocation3 [shape = 's32[2]{0}', space=sflag, size = 0x8, scoped, tag = 'scoped memory for tpu_custom_call.1']
    %8 = vsyncpa [#allocation3], 0
    %s9 = scalar_lea.sflag [#allocation3], 1
    %10 = vsyncpa %s9, 0
    loop: start=0, step=1, limit=4
    $region2: #{tpu_custom_call.1} parent=1 // loop_pre_header
      _
    $region3: #{tpu_custom_call.1} parent=1 // loop_header
      %s12 = sphi 0, %s16
      %p13 = scmp.ge.s32.totalorder %s12, 4
      %s22 = sphi 0, %s24
      %s25 = sphi 0, %s22
      %s26 = sphi 0, %s25
      %s42 = sphi 0, %s26
      %s48 = sphi 0, %s50
      %s51 = sphi 0, %s48
      %s52 = sphi 0, %s51
      %s68 = sphi 0, %s52
      %s74 = sphi 0, %s76
      %s77 = sphi 0, %s74
      %s78 = sphi 0, %s77
      %s94 = sphi 0, %s78
      %s100 = sphi 0, %s102
      %s103 = sphi 0, %s100
      %s104 = sphi 0, %s103
      %s120 = sphi 0, %s104
    $region4: #{tpu_custom_call.1} parent=1 // loop_header_branch
      %15 = sbr.rel (%p13) target = $region8
    $region5: #{tpu_custom_call.1} parent=1 // loop_body
      %s17 = ssub.s32 %s12, 1
      %s18 = ssub.s32 %s12, 2
      %s19 = sadd.s32 %s12, 1
      %s20 = ssub.s32 %s12, %s19
      %p21 = scmp.eq.s32.totalorder %s20, 0
      %s23 = sadd.s32 %s22, 1
      %s24 = scalar_select %p21, %s22, %s23
      %p27 = pneg %p21
      %p28 = scmp.eq.s32.totalorder %s12, 1
      %p29 = por %p27, %p28
      %p30 = scmp.ne.s32.totalorder %s22, %s25
      %p31 = scmp.eq.s32.totalorder %s12, 0
      %p32 = por %p30, %p31
      %p33 = scmp.ne.s32.totalorder %s22, %s25
      %p34 = scmp.eq.s32.totalorder %s17, 1
      %p35 = por %p33, %p34
      %p36 = scmp.ne.s32.totalorder %s25, %s26
      %p37 = scmp.eq.s32.totalorder %s17, 0
      %p38 = por %p36, %p37
      %p39 = scmp.ne.s32.totalorder %s25, %s26
      %p40 = scmp.eq.s32.totalorder %s18, 1
      %p41 = por %p39, %p40
      %p43 = scmp.ne.s32.totalorder %s26, %s42
      %p44 = scmp.eq.s32.totalorder %s18, 0
      %p45 = por %p43, %p44
      %s46 = ssub.s32 %s12, %s19
      %p47 = scmp.eq.s32.totalorder %s46, 0
      %s49 = sadd.s32 %s48, 1
      %s50 = scalar_select %p47, %s48, %s49
      %p53 = pneg %p47
      %p54 = scmp.eq.s32.totalorder %s12, 1
      %p55 = por %p53, %p54
      %p56 = scmp.ne.s32.totalorder %s48, %s51
      %p57 = scmp.eq.s32.totalorder %s12, 0
      %p58 = por %p56, %p57
      %p59 = scmp.ne.s32.totalorder %s48, %s51
      %p60 = scmp.eq.s32.totalorder %s17, 1
      %p61 = por %p59, %p60
      %p62 = scmp.ne.s32.totalorder %s51, %s52
      %p63 = scmp.eq.s32.totalorder %s17, 0
      %p64 = por %p62, %p63
      %p65 = scmp.ne.s32.totalorder %s51, %s52
      %p66 = scmp.eq.s32.totalorder %s18, 1
      %p67 = por %p65, %p66
      %p69 = scmp.ne.s32.totalorder %s52, %s68
      %p70 = scmp.eq.s32.totalorder %s18, 0
      %p71 = por %p69, %p70
      %s72 = ssub.s32 %s12, %s19
      %p73 = scmp.eq.s32.totalorder %s72, 0
      %s75 = sadd.s32 %s74, 1
      %s76 = scalar_select %p73, %s74, %s75
      %p79 = pneg %p73
      %p80 = scmp.eq.s32.totalorder %s12, 1
      %p81 = por %p79, %p80
      %p82 = scmp.ne.s32.totalorder %s74, %s77
      %p83 = scmp.eq.s32.totalorder %s12, 0
      %p84 = por %p82, %p83
      %p85 = scmp.ne.s32.totalorder %s74, %s77
      %p86 = scmp.eq.s32.totalorder %s17, 1
      %p87 = por %p85, %p86
      %p88 = scmp.ne.s32.totalorder %s77, %s78
      %p89 = scmp.eq.s32.totalorder %s17, 0
      %p90 = por %p88, %p89
      %p91 = scmp.ne.s32.totalorder %s77, %s78
      %p92 = scmp.eq.s32.totalorder %s18, 1
      %p93 = por %p91, %p92
      %p95 = scmp.ne.s32.totalorder %s78, %s94
      %p96 = scmp.eq.s32.totalorder %s18, 0
      %p97 = por %p95, %p96
      %s98 = ssub.s32 %s12, %s19
      %p99 = scmp.eq.s32.totalorder %s98, 0
      %s101 = sadd.s32 %s100, 1
      %s102 = scalar_select %p99, %s100, %s101
      %p105 = pneg %p99
      %p106 = scmp.eq.s32.totalorder %s12, 1
      %p107 = por %p105, %p106
      %p108 = scmp.ne.s32.totalorder %s100, %s103
      %p109 = scmp.eq.s32.totalorder %s12, 0
      %p110 = por %p108, %p109
      %p111 = scmp.ne.s32.totalorder %s100, %s103
      %p112 = scmp.eq.s32.totalorder %s17, 1
      %p113 = por %p111, %p112
      %p114 = scmp.ne.s32.totalorder %s103, %s104
      %p115 = scmp.eq.s32.totalorder %s17, 0
      %p116 = por %p114, %p115
      %p117 = scmp.ne.s32.totalorder %s103, %s104
      %p118 = scmp.eq.s32.totalorder %s18, 1
      %p119 = por %p117, %p118
      %p121 = scmp.ne.s32.totalorder %s104, %s120
      %p122 = scmp.eq.s32.totalorder %s18, 0
      %p123 = por %p121, %p122
      %p124 = scmp.le.s32.totalorder 1, %s12
      %p125 = scmp.lt.s32.totalorder %s12, 3
      %p126 = pnand %p124, %p125
      %p127 = pneg %p126
      // Predicated region
      $region9: #{tpu_custom_call.1} parent=5 // pred_check
        _
      $region10: #{tpu_custom_call.1} parent=5 // pred_check_branch
        %129 = sbr.rel (%p126) target = $region12
      $region11: #{tpu_custom_call.1} parent=5 // pred_region
        %s130 = ssub.s32 %s12, 1
      $region12: #{tpu_custom_call.1} parent=5 // pred_fallthru
        _
      %p131 = scmp.lt.s32.totalorder %s12, 2
      // Predicated region
      $region13: #{tpu_custom_call.1} parent=5 // pred_check
        %p132 = pneg %p131
      $region14: #{tpu_custom_call.1} parent=5 // pred_check_branch
        %134 = sbr.rel (%p132) target = $region16
      $region15: #{tpu_custom_call.1} parent=5 // pred_region
        // Predicated region
        $region17: #{tpu_custom_call.1} parent=15 // pred_check
          %p135 = pneg %p32
        $region18: #{tpu_custom_call.1} parent=15 // pred_check_branch
          %137 = sbr.rel (%p135) target = $region20
        $region19: #{tpu_custom_call.1} parent=15 // pred_region
          %p138 = scmp.lt.s32.totalorder %s12, 1
          %s139 = scalar_select %p138, %s12, 1
          %s140 = smul.addr %s139, 20
          %s141 = smul.addr %s140, 4
          %s142 = scalar_lea.vmem %s0, %s141
        $region20: #{tpu_custom_call.1} parent=15 // pred_fallthru
          _
        // Predicated region
        $region21: #{tpu_custom_call.1} parent=15 // pred_check
          %p143 = pneg %p58
        $region22: #{tpu_custom_call.1} parent=15 // pred_check_branch
          %145 = sbr.rel (%p143) target = $region24
        $region23: #{tpu_custom_call.1} parent=15 // pred_region
          %p146 = scmp.lt.s32.totalorder %s12, 1
          %s147 = scalar_select %p146, %s12, 1
          %s148 = smul.addr %s147, 160
          %s149 = smul.addr %s148, 4
          %s150 = scalar_lea.vmem %s1, %s149
        $region24: #{tpu_custom_call.1} parent=15 // pred_fallthru
          _
        // Predicated region
        $region25: #{tpu_custom_call.1} parent=15 // pred_check
          %p151 = pneg %p84
        $region26: #{tpu_custom_call.1} parent=15 // pred_check_branch
          %153 = sbr.rel (%p151) target = $region28
        $region27: #{tpu_custom_call.1} parent=15 // pred_region
          %p154 = scmp.lt.s32.totalorder %s12, 1
          %s155 = scalar_select %p154, %s12, 1
          %s156 = scalar_lea.vmem %s2, %s155
        $region28: #{tpu_custom_call.1} parent=15 // pred_fallthru
          _
      $region16: #{tpu_custom_call.1} parent=5 // pred_fallthru
        _
      %p157 = scmp.le.s32.totalorder 1, %s12
      %p158 = scmp.lt.s32.totalorder %s12, 3
      %p159 = pnand %p157, %p158
      %p160 = pneg %p159
      // Predicated region
      $region29: #{tpu_custom_call.1} parent=5 // pred_check
        _
      $region30: #{tpu_custom_call.1} parent=5 // pred_check_branch
        %162 = sbr.rel (%p159) target = $region32
      $region31: #{tpu_custom_call.1} parent=5 // pred_region
        %s163 = ssub.s32 %s12, 1
        %p164 = scmp.lt.s32.totalorder %s17, 1
        %s165 = scalar_select %p164, %s17, 1
        %s166 = smul.addr %s165, 20
        %s167 = smul.addr %s166, 4
        %s168 = scalar_lea.vmem %s0, %s167
        %p169 = pneg %p38
        %p170 = pneg %p35
        %p171 = scmp.lt.s32.totalorder %s17, 1
        %s172 = scalar_select %p171, %s17, 1
        %s173 = smul.addr %s172, 160
        %s174 = smul.addr %s173, 4
        %s175 = scalar_lea.vmem %s1, %s174
        %p176 = pneg %p64
        %p177 = pneg %p61
        %p178 = scmp.lt.s32.totalorder %s17, 1
        %s179 = scalar_select %p178, %s17, 1
        %s180 = scalar_lea.vmem %s2, %s179
        %p181 = pneg %p90
        %p182 = pneg %p87
        %p183 = pneg %p116
        %p184 = pneg %p113
        %s185 = sand.u32 %s103, 1
        %s186 = scalar_lea.sflag [#allocation3], %s185
        %s187 = sand.u32 %s103, 1
        %s188 = smul.addr %s187, 16
        %s189 = scalar_lea.vmem [#allocation2], %s188
        %p190 = scmp.lt.s32.totalorder %s17, 1
        %s191 = scalar_select %p190, %s17, 1
        %s192 = smul.addr %s191, 20
        %s193 = smul.addr %s192, 4
        %s194 = scalar_lea.vmem %s0, %s193
        %p195 = scmp.lt.s32.totalorder %s17, 1
        %s196 = scalar_select %p195, %s17, 1
        %s197 = smul.addr %s196, 160
        %s198 = smul.addr %s197, 4
        %s199 = scalar_lea.vmem %s1, %s198
        %p200 = scmp.lt.s32.totalorder %s17, 1
        %s201 = scalar_select %p200, %s17, 1
        %s202 = scalar_lea.vmem %s2, %s201
        %v204 = vld [vmem:[%s194] sm:$0xff]
        %v205 = vld [vmem:[%s194 + $0x8] sm:$0xff]
        %v206 = vld [vmem:[%s194 + $0x10] sm:$0xff]
        %v207 = vld [vmem:[%s194 + $0x18] sm:$0xff]
        %v208 = vld [vmem:[%s194 + $0x20] sm:$0xff]
        %v209 = vld [vmem:[%s194 + $0x28] sm:$0xff]
        %v210 = vld [vmem:[%s194 + $0x30] sm:$0xff]
        %v211 = vld [vmem:[%s194 + $0x38] sm:$0xff]
        %v212 = vld [vmem:[%s194 + $0x40] sm:$0xff]
        %v213 = vld [vmem:[%s194 + $0x48] sm:$0xff]
        %v214 = vld [vmem:[%s199] sm:$0xf]
        %v215 = vld [vmem:[%s199 + $0x4] sm:$0xf]
        %v216 = vld [vmem:[%s199 + $0x8] sm:$0xf]
        %v217 = vld [vmem:[%s199 + $0xc] sm:$0xf]
        %v218 = vld [vmem:[%s199 + $0x10] sm:$0xf]
        %v219 = vld [vmem:[%s199 + $0x14] sm:$0xf]
        %v220 = vld [vmem:[%s199 + $0x18] sm:$0xf]
        %v221 = vld [vmem:[%s199 + $0x1c] sm:$0xf]
        %v222 = vld [vmem:[%s199 + $0x20] sm:$0xf]
        %v223 = vld [vmem:[%s199 + $0x24] sm:$0xf]
        %v224 = vld [vmem:[%s199 + $0x28] sm:$0xf]
        %v225 = vld [vmem:[%s199 + $0x2c] sm:$0xf]
        %v226 = vld [vmem:[%s199 + $0x30] sm:$0xf]
        %v227 = vld [vmem:[%s199 + $0x34] sm:$0xf]
        %v228 = vld [vmem:[%s199 + $0x38] sm:$0xf]
        %v229 = vld [vmem:[%s199 + $0x3c] sm:$0xf]
        %v230 = vld [vmem:[%s199 + $0x40] sm:$0xf]
        %v231 = vld [vmem:[%s199 + $0x44] sm:$0xf]
        %v232 = vld [vmem:[%s199 + $0x48] sm:$0xf]
        %v233 = vld [vmem:[%s199 + $0x4c] sm:$0xf]
        %v234 = vld [vmem:[%s199 + $0x50] sm:$0xf]
        %v235 = vld [vmem:[%s199 + $0x54] sm:$0xf]
        %v236 = vld [vmem:[%s199 + $0x58] sm:$0xf]
        %v237 = vld [vmem:[%s199 + $0x5c] sm:$0xf]
        %v238 = vld [vmem:[%s199 + $0x60] sm:$0xf]
        %v239 = vld [vmem:[%s199 + $0x64] sm:$0xf]
        %v240 = vld [vmem:[%s199 + $0x68] sm:$0xf]
        %v241 = vld [vmem:[%s199 + $0x6c] sm:$0xf]
        %v242 = vld [vmem:[%s199 + $0x70] sm:$0xf]
        %v243 = vld [vmem:[%s199 + $0x74] sm:$0xf]
        %v244 = vld [vmem:[%s199 + $0x78] sm:$0xf]
        %v245 = vld [vmem:[%s199 + $0x7c] sm:$0xf]
        %v246 = vld [vmem:[%s199 + $0x80] sm:$0xf]
        %v247 = vld [vmem:[%s199 + $0x84] sm:$0xf]
        %v248 = vld [vmem:[%s199 + $0x88] sm:$0xf]
        %v249 = vld [vmem:[%s199 + $0x8c] sm:$0xf]
        %v250 = vld [vmem:[%s199 + $0x90] sm:$0xf]
        %v251 = vld [vmem:[%s199 + $0x94] sm:$0xf]
        %v252 = vld [vmem:[%s199 + $0x98] sm:$0xf]
        %v253 = vld [vmem:[%s199 + $0x9c] sm:$0xf]
        %v254 = vld [vmem:[%s199 + $0xa0] sm:$0xf]
        %v255 = vld [vmem:[%s199 + $0xa4] sm:$0xf]
        %v256 = vld [vmem:[%s199 + $0xa8] sm:$0xf]
        %v257 = vld [vmem:[%s199 + $0xac] sm:$0xf]
        %v258 = vld [vmem:[%s199 + $0xb0] sm:$0xf]
        %v259 = vld [vmem:[%s199 + $0xb4] sm:$0xf]
        %v260 = vld [vmem:[%s199 + $0xb8] sm:$0xf]
        %v261 = vld [vmem:[%s199 + $0xbc] sm:$0xf]
        %v262 = vld [vmem:[%s199 + $0xc0] sm:$0xf]
        %v263 = vld [vmem:[%s199 + $0xc4] sm:$0xf]
        %v264 = vld [vmem:[%s199 + $0xc8] sm:$0xf]
        %v265 = vld [vmem:[%s199 + $0xcc] sm:$0xf]
        %v266 = vld [vmem:[%s199 + $0xd0] sm:$0xf]
        %v267 = vld [vmem:[%s199 + $0xd4] sm:$0xf]
        %v268 = vld [vmem:[%s199 + $0xd8] sm:$0xf]
        %v269 = vld [vmem:[%s199 + $0xdc] sm:$0xf]
        %v270 = vld [vmem:[%s199 + $0xe0] sm:$0xf]
        %v271 = vld [vmem:[%s199 + $0xe4] sm:$0xf]
        %v272 = vld [vmem:[%s199 + $0xe8] sm:$0xf]
        %v273 = vld [vmem:[%s199 + $0xec] sm:$0xf]
        %v274 = vld [vmem:[%s199 + $0xf0] sm:$0xf]
        %v275 = vld [vmem:[%s199 + $0xf4] sm:$0xf]
        %v276 = vld [vmem:[%s199 + $0xf8] sm:$0xf]
        %v277 = vld [vmem:[%s199 + $0xfc] sm:$0xf]
        %v278 = vld [vmem:[%s199 + $0x100] sm:$0xf]
        %v279 = vld [vmem:[%s199 + $0x104] sm:$0xf]
        %v280 = vld [vmem:[%s199 + $0x108] sm:$0xf]
        %v281 = vld [vmem:[%s199 + $0x10c] sm:$0xf]
        %v282 = vld [vmem:[%s199 + $0x110] sm:$0xf]
        %v283 = vld [vmem:[%s199 + $0x114] sm:$0xf]
        %v284 = vld [vmem:[%s199 + $0x118] sm:$0xf]
        %v285 = vld [vmem:[%s199 + $0x11c] sm:$0xf]
        %v286 = vld [vmem:[%s199 + $0x120] sm:$0xf]
        %v287 = vld [vmem:[%s199 + $0x124] sm:$0xf]
        %v288 = vld [vmem:[%s199 + $0x128] sm:$0xf]
        %v289 = vld [vmem:[%s199 + $0x12c] sm:$0xf]
        %v290 = vld [vmem:[%s199 + $0x130] sm:$0xf]
        %v291 = vld [vmem:[%s199 + $0x134] sm:$0xf]
        %v292 = vld [vmem:[%s199 + $0x138] sm:$0xf]
        %v293 = vld [vmem:[%s199 + $0x13c] sm:$0xf]
        %v294 = vld [vmem:[%s199 + $0x140] sm:$0xf]
        %v295 = vld [vmem:[%s199 + $0x144] sm:$0xf]
        %v296 = vld [vmem:[%s199 + $0x148] sm:$0xf]
        %v297 = vld [vmem:[%s199 + $0x14c] sm:$0xf]
        %v298 = vld [vmem:[%s199 + $0x150] sm:$0xf]
        %v299 = vld [vmem:[%s199 + $0x154] sm:$0xf]
        %v300 = vld [vmem:[%s199 + $0x158] sm:$0xf]
        %v301 = vld [vmem:[%s199 + $0x15c] sm:$0xf]
        %v302 = vld [vmem:[%s199 + $0x160] sm:$0xf]
        %v303 = vld [vmem:[%s199 + $0x164] sm:$0xf]
        %v304 = vld [vmem:[%s199 + $0x168] sm:$0xf]
        %v305 = vld [vmem:[%s199 + $0x16c] sm:$0xf]
        %v306 = vld [vmem:[%s199 + $0x170] sm:$0xf]
        %v307 = vld [vmem:[%s199 + $0x174] sm:$0xf]
        %v308 = vld [vmem:[%s199 + $0x178] sm:$0xf]
        %v309 = vld [vmem:[%s199 + $0x17c] sm:$0xf]
        %v310 = vld [vmem:[%s199 + $0x180] sm:$0xf]
        %v311 = vld [vmem:[%s199 + $0x184] sm:$0xf]
        %v312 = vld [vmem:[%s199 + $0x188] sm:$0xf]
        %v313 = vld [vmem:[%s199 + $0x18c] sm:$0xf]
        %v314 = vld [vmem:[%s199 + $0x190] sm:$0xf]
        %v315 = vld [vmem:[%s199 + $0x194] sm:$0xf]
        %v316 = vld [vmem:[%s199 + $0x198] sm:$0xf]
        %v317 = vld [vmem:[%s199 + $0x19c] sm:$0xf]
        %v318 = vld [vmem:[%s199 + $0x1a0] sm:$0xf]
        %v319 = vld [vmem:[%s199 + $0x1a4] sm:$0xf]
        %v320 = vld [vmem:[%s199 + $0x1a8] sm:$0xf]
        %v321 = vld [vmem:[%s199 + $0x1ac] sm:$0xf]
        %v322 = vld [vmem:[%s199 + $0x1b0] sm:$0xf]
        %v323 = vld [vmem:[%s199 + $0x1b4] sm:$0xf]
        %v324 = vld [vmem:[%s199 + $0x1b8] sm:$0xf]
        %v325 = vld [vmem:[%s199 + $0x1bc] sm:$0xf]
        %v326 = vld [vmem:[%s199 + $0x1c0] sm:$0xf]
        %v327 = vld [vmem:[%s199 + $0x1c4] sm:$0xf]
        %v328 = vld [vmem:[%s199 + $0x1c8] sm:$0xf]
        %v329 = vld [vmem:[%s199 + $0x1cc] sm:$0xf]
        %v330 = vld [vmem:[%s199 + $0x1d0] sm:$0xf]
        %v331 = vld [vmem:[%s199 + $0x1d4] sm:$0xf]
        %v332 = vld [vmem:[%s199 + $0x1d8] sm:$0xf]
        %v333 = vld [vmem:[%s199 + $0x1dc] sm:$0xf]
        %v334 = vld [vmem:[%s199 + $0x1e0] sm:$0xf]
        %v335 = vld [vmem:[%s199 + $0x1e4] sm:$0xf]
        %v336 = vld [vmem:[%s199 + $0x1e8] sm:$0xf]
        %v337 = vld [vmem:[%s199 + $0x1ec] sm:$0xf]
        %v338 = vld [vmem:[%s199 + $0x1f0] sm:$0xf]
        %v339 = vld [vmem:[%s199 + $0x1f4] sm:$0xf]
        %v340 = vld [vmem:[%s199 + $0x1f8] sm:$0xf]
        %v341 = vld [vmem:[%s199 + $0x1fc] sm:$0xf]
        %v342 = vld [vmem:[%s199 + $0x200] sm:$0xf]
        %v343 = vld [vmem:[%s199 + $0x204] sm:$0xf]
        %v344 = vld [vmem:[%s199 + $0x208] sm:$0xf]
        %v345 = vld [vmem:[%s199 + $0x20c] sm:$0xf]
        %v346 = vld [vmem:[%s199 + $0x210] sm:$0xf]
        %v347 = vld [vmem:[%s199 + $0x214] sm:$0xf]
        %v348 = vld [vmem:[%s199 + $0x218] sm:$0xf]
        %v349 = vld [vmem:[%s199 + $0x21c] sm:$0xf]
        %v350 = vld [vmem:[%s199 + $0x220] sm:$0xf]
        %v351 = vld [vmem:[%s199 + $0x224] sm:$0xf]
        %v352 = vld [vmem:[%s199 + $0x228] sm:$0xf]
        %v353 = vld [vmem:[%s199 + $0x22c] sm:$0xf]
        %v354 = vld [vmem:[%s199 + $0x230] sm:$0xf]
        %v355 = vld [vmem:[%s199 + $0x234] sm:$0xf]
        %v356 = vld [vmem:[%s199 + $0x238] sm:$0xf]
        %v357 = vld [vmem:[%s199 + $0x23c] sm:$0xf]
        %v358 = vld [vmem:[%s199 + $0x240] sm:$0xf]
        %v359 = vld [vmem:[%s199 + $0x244] sm:$0xf]
        %v360 = vld [vmem:[%s199 + $0x248] sm:$0xf]
        %v361 = vld [vmem:[%s199 + $0x24c] sm:$0xf]
        %v362 = vld [vmem:[%s199 + $0x250] sm:$0xf]
        %v363 = vld [vmem:[%s199 + $0x254] sm:$0xf]
        %v364 = vld [vmem:[%s199 + $0x258] sm:$0xf]
        %v365 = vld [vmem:[%s199 + $0x25c] sm:$0xf]
        %v366 = vld [vmem:[%s199 + $0x260] sm:$0xf]
        %v367 = vld [vmem:[%s199 + $0x264] sm:$0xf]
        %v368 = vld [vmem:[%s199 + $0x268] sm:$0xf]
        %v369 = vld [vmem:[%s199 + $0x26c] sm:$0xf]
        %v370 = vld [vmem:[%s199 + $0x270] sm:$0xf]
        %v371 = vld [vmem:[%s199 + $0x274] sm:$0xf]
        %v372 = vld [vmem:[%s199 + $0x278] sm:$0xf]
        %v373 = vld [vmem:[%s199 + $0x27c] sm:$0xf]
        %v374 = vld [vmem:[%s202] sm:$0x1]
        %v376 = vlaneseq
        %v377 = vshrl.u32 %v376, 7
        %v378 = vsub.s32 0, %v377
        %v379 = vrot.slane %v374, %v378
        %v391 = vunpack.c.l.b16 %v204
        %v392 = vunpack.c.h.b16 %v204
        %v393 = vunpack.c.l.b16 %v205
        %v394 = vunpack.c.h.b16 %v205
        %v395 = vunpack.c.l.b16 %v206
        %v396 = vunpack.c.h.b16 %v206
        %v397 = vunpack.c.l.b16 %v207
        %v398 = vunpack.c.h.b16 %v207
        %v399 = vunpack.c.l.b16 %v208
        %v400 = vunpack.c.h.b16 %v208
        %v401 = vunpack.c.l.b16 %v209
        %v402 = vunpack.c.h.b16 %v209
        %v403 = vunpack.c.l.b16 %v210
        %v404 = vunpack.c.h.b16 %v210
        %v405 = vunpack.c.l.b16 %v211
        %v406 = vunpack.c.h.b16 %v211
        %v407 = vunpack.c.l.b16 %v212
        %v408 = vunpack.c.h.b16 %v212
        %v409 = vunpack.c.l.b16 %v213
        %v410 = vunpack.c.h.b16 %v213
        %v411 = vpack.c.b16 %v401, %v391
        %v412 = vpack.c.b16 %v402, %v392
        %v413 = vpack.c.b16 %v403, %v393
        %v414 = vpack.c.b16 %v404, %v394
        %v415 = vpack.c.b16 %v405, %v395
        %v416 = vpack.c.b16 %v406, %v396
        %v417 = vpack.c.b16 %v407, %v397
        %v418 = vpack.c.b16 %v408, %v398
        %v419 = vpack.c.b16 %v409, %v399
        %v420 = vpack.c.b16 %v410, %v400
        %v591 = vunpack.c.l.b16 %v214
        %v592 = vunpack.c.l.b16 %v215
        %v593 = vunpack.c.l.b16 %v216
        %v594 = vunpack.c.l.b16 %v217
        %v595 = vunpack.c.l.b16 %v218
        %v596 = vunpack.c.l.b16 %v219
        %v597 = vunpack.c.l.b16 %v220
        %v598 = vunpack.c.l.b16 %v221
        %v599 = vunpack.c.l.b16 %v222
        %v600 = vunpack.c.l.b16 %v223
        %v601 = vunpack.c.l.b16 %v224
        %v602 = vunpack.c.l.b16 %v225
        %v603 = vunpack.c.l.b16 %v226
        %v604 = vunpack.c.l.b16 %v227
        %v605 = vunpack.c.l.b16 %v228
        %v606 = vunpack.c.l.b16 %v229
        %v607 = vunpack.c.l.b16 %v230
        %v608 = vunpack.c.l.b16 %v231
        %v609 = vunpack.c.l.b16 %v232
        %v610 = vunpack.c.l.b16 %v233
        %v611 = vunpack.c.l.b16 %v234
        %v612 = vunpack.c.l.b16 %v235
        %v613 = vunpack.c.l.b16 %v236
        %v614 = vunpack.c.l.b16 %v237
        %v615 = vunpack.c.l.b16 %v238
        %v616 = vunpack.c.l.b16 %v239
        %v617 = vunpack.c.l.b16 %v240
        %v618 = vunpack.c.l.b16 %v241
        %v619 = vunpack.c.l.b16 %v242
        %v620 = vunpack.c.l.b16 %v243
        %v621 = vunpack.c.l.b16 %v244
        %v622 = vunpack.c.l.b16 %v245
        %v623 = vunpack.c.l.b16 %v246
        %v624 = vunpack.c.l.b16 %v247
        %v625 = vunpack.c.l.b16 %v248
        %v626 = vunpack.c.l.b16 %v249
        %v627 = vunpack.c.l.b16 %v250
        %v628 = vunpack.c.l.b16 %v251
        %v629 = vunpack.c.l.b16 %v252
        %v630 = vunpack.c.l.b16 %v253
        %v631 = vunpack.c.l.b16 %v254
        %v632 = vunpack.c.l.b16 %v255
        %v633 = vunpack.c.l.b16 %v256
        %v634 = vunpack.c.l.b16 %v257
        %v635 = vunpack.c.l.b16 %v258
        %v636 = vunpack.c.l.b16 %v259
        %v637 = vunpack.c.l.b16 %v260
        %v638 = vunpack.c.l.b16 %v261
        %v639 = vunpack.c.l.b16 %v262
        %v640 = vunpack.c.l.b16 %v263
        %v641 = vunpack.c.l.b16 %v264
        %v642 = vunpack.c.l.b16 %v265
        %v643 = vunpack.c.l.b16 %v266
        %v644 = vunpack.c.l.b16 %v267
        %v645 = vunpack.c.l.b16 %v268
        %v646 = vunpack.c.l.b16 %v269
        %v647 = vunpack.c.l.b16 %v270
        %v648 = vunpack.c.l.b16 %v271
        %v649 = vunpack.c.l.b16 %v272
        %v650 = vunpack.c.l.b16 %v273
        %v651 = vunpack.c.l.b16 %v274
        %v652 = vunpack.c.l.b16 %v275
        %v653 = vunpack.c.l.b16 %v276
        %v654 = vunpack.c.l.b16 %v277
        %v655 = vunpack.c.l.b16 %v278
        %v656 = vunpack.c.l.b16 %v279
        %v657 = vunpack.c.l.b16 %v280
        %v658 = vunpack.c.l.b16 %v281
        %v659 = vunpack.c.l.b16 %v282
        %v660 = vunpack.c.l.b16 %v283
        %v661 = vunpack.c.l.b16 %v284
        %v662 = vunpack.c.l.b16 %v285
        %v663 = vunpack.c.l.b16 %v286
        %v664 = vunpack.c.l.b16 %v287
        %v665 = vunpack.c.l.b16 %v288
        %v666 = vunpack.c.l.b16 %v289
        %v667 = vunpack.c.l.b16 %v290
        %v668 = vunpack.c.l.b16 %v291
        %v669 = vunpack.c.l.b16 %v292
        %v670 = vunpack.c.l.b16 %v293
        %v671 = vunpack.c.l.b16 %v294
        %v672 = vunpack.c.l.b16 %v295
        %v673 = vunpack.c.l.b16 %v296
        %v674 = vunpack.c.l.b16 %v297
        %v675 = vunpack.c.l.b16 %v298
        %v676 = vunpack.c.l.b16 %v299
        %v677 = vunpack.c.l.b16 %v300
        %v678 = vunpack.c.l.b16 %v301
        %v679 = vunpack.c.l.b16 %v302
        %v680 = vunpack.c.l.b16 %v303
        %v681 = vunpack.c.l.b16 %v304
        %v682 = vunpack.c.l.b16 %v305
        %v683 = vunpack.c.l.b16 %v306
        %v684 = vunpack.c.l.b16 %v307
        %v685 = vunpack.c.l.b16 %v308
        %v686 = vunpack.c.l.b16 %v309
        %v687 = vunpack.c.l.b16 %v310
        %v688 = vunpack.c.l.b16 %v311
        %v689 = vunpack.c.l.b16 %v312
        %v690 = vunpack.c.l.b16 %v313
        %v691 = vunpack.c.l.b16 %v314
        %v692 = vunpack.c.l.b16 %v315
        %v693 = vunpack.c.l.b16 %v316
        %v694 = vunpack.c.l.b16 %v317
        %v695 = vunpack.c.l.b16 %v318
        %v696 = vunpack.c.l.b16 %v319
        %v697 = vunpack.c.l.b16 %v320
        %v698 = vunpack.c.l.b16 %v321
        %v699 = vunpack.c.l.b16 %v322
        %v700 = vunpack.c.l.b16 %v323
        %v701 = vunpack.c.l.b16 %v324
        %v702 = vunpack.c.l.b16 %v325
        %v703 = vunpack.c.l.b16 %v326
        %v704 = vunpack.c.l.b16 %v327
        %v705 = vunpack.c.l.b16 %v328
        %v706 = vunpack.c.l.b16 %v329
        %v707 = vunpack.c.l.b16 %v330
        %v708 = vunpack.c.l.b16 %v331
        %v709 = vunpack.c.l.b16 %v332
        %v710 = vunpack.c.l.b16 %v333
        %v711 = vunpack.c.l.b16 %v334
        %v712 = vunpack.c.l.b16 %v335
        %v713 = vunpack.c.l.b16 %v336
        %v714 = vunpack.c.l.b16 %v337
        %v715 = vunpack.c.l.b16 %v338
        %v716 = vunpack.c.l.b16 %v339
        %v717 = vunpack.c.l.b16 %v340
        %v718 = vunpack.c.l.b16 %v341
        %v719 = vunpack.c.l.b16 %v342
        %v720 = vunpack.c.l.b16 %v343
        %v721 = vunpack.c.l.b16 %v344
        %v722 = vunpack.c.l.b16 %v345
        %v723 = vunpack.c.l.b16 %v346
        %v724 = vunpack.c.l.b16 %v347
        %v725 = vunpack.c.l.b16 %v348
        %v726 = vunpack.c.l.b16 %v349
        %v727 = vunpack.c.l.b16 %v350
        %v728 = vunpack.c.l.b16 %v351
        %v729 = vunpack.c.l.b16 %v352
        %v730 = vunpack.c.l.b16 %v353
        %v731 = vunpack.c.l.b16 %v354
        %v732 = vunpack.c.l.b16 %v355
        %v733 = vunpack.c.l.b16 %v356
        %v734 = vunpack.c.l.b16 %v357
        %v735 = vunpack.c.l.b16 %v358
        %v736 = vunpack.c.l.b16 %v359
        %v737 = vunpack.c.l.b16 %v360
        %v738 = vunpack.c.l.b16 %v361
        %v739 = vunpack.c.l.b16 %v362
        %v740 = vunpack.c.l.b16 %v363
        %v741 = vunpack.c.l.b16 %v364
        %v742 = vunpack.c.l.b16 %v365
        %v743 = vunpack.c.l.b16 %v366
        %v744 = vunpack.c.l.b16 %v367
        %v745 = vunpack.c.l.b16 %v368
        %v746 = vunpack.c.l.b16 %v369
        %v747 = vunpack.c.l.b16 %v370
        %v748 = vunpack.c.l.b16 %v371
        %v749 = vunpack.c.l.b16 %v372
        %v750 = vunpack.c.l.b16 %v373
        %v751 = vpack.c.b16 %v592, %v591
        %v752 = vpack.c.b16 %v594, %v593
        %v753 = vpack.c.b16 %v596, %v595
        %v754 = vpack.c.b16 %v598, %v597
        %v755 = vpack.c.b16 %v600, %v599
        %v756 = vpack.c.b16 %v602, %v601
        %v757 = vpack.c.b16 %v604, %v603
        %v758 = vpack.c.b16 %v606, %v605
        %v759 = vpack.c.b16 %v608, %v607
        %v760 = vpack.c.b16 %v610, %v609
        %v761 = vpack.c.b16 %v612, %v611
        %v762 = vpack.c.b16 %v614, %v613
        %v763 = vpack.c.b16 %v616, %v615
        %v764 = vpack.c.b16 %v618, %v617
        %v765 = vpack.c.b16 %v620, %v619
        %v766 = vpack.c.b16 %v622, %v621
        %v767 = vpack.c.b16 %v624, %v623
        %v768 = vpack.c.b16 %v626, %v625
        %v769 = vpack.c.b16 %v628, %v627
        %v770 = vpack.c.b16 %v630, %v629
        %v771 = vpack.c.b16 %v632, %v631
        %v772 = vpack.c.b16 %v634, %v633
        %v773 = vpack.c.b16 %v636, %v635
        %v774 = vpack.c.b16 %v638, %v637
        %v775 = vpack.c.b16 %v640, %v639
        %v776 = vpack.c.b16 %v642, %v641
        %v777 = vpack.c.b16 %v644, %v643
        %v778 = vpack.c.b16 %v646, %v645
        %v779 = vpack.c.b16 %v648, %v647
        %v780 = vpack.c.b16 %v650, %v649
        %v781 = vpack.c.b16 %v652, %v651
        %v782 = vpack.c.b16 %v654, %v653
        %v783 = vpack.c.b16 %v656, %v655
        %v784 = vpack.c.b16 %v658, %v657
        %v785 = vpack.c.b16 %v660, %v659
        %v786 = vpack.c.b16 %v662, %v661
        %v787 = vpack.c.b16 %v664, %v663
        %v788 = vpack.c.b16 %v666, %v665
        %v789 = vpack.c.b16 %v668, %v667
        %v790 = vpack.c.b16 %v670, %v669
        %v791 = vpack.c.b16 %v672, %v671
        %v792 = vpack.c.b16 %v674, %v673
        %v793 = vpack.c.b16 %v676, %v675
        %v794 = vpack.c.b16 %v678, %v677
        %v795 = vpack.c.b16 %v680, %v679
        %v796 = vpack.c.b16 %v682, %v681
        %v797 = vpack.c.b16 %v684, %v683
        %v798 = vpack.c.b16 %v686, %v685
        %v799 = vpack.c.b16 %v688, %v687
        %v800 = vpack.c.b16 %v690, %v689
        %v801 = vpack.c.b16 %v692, %v691
        %v802 = vpack.c.b16 %v694, %v693
        %v803 = vpack.c.b16 %v696, %v695
        %v804 = vpack.c.b16 %v698, %v697
        %v805 = vpack.c.b16 %v700, %v699
        %v806 = vpack.c.b16 %v702, %v701
        %v807 = vpack.c.b16 %v704, %v703
        %v808 = vpack.c.b16 %v706, %v705
        %v809 = vpack.c.b16 %v708, %v707
        %v810 = vpack.c.b16 %v710, %v709
        %v811 = vpack.c.b16 %v712, %v711
        %v812 = vpack.c.b16 %v714, %v713
        %v813 = vpack.c.b16 %v716, %v715
        %v814 = vpack.c.b16 %v718, %v717
        %v815 = vpack.c.b16 %v720, %v719
        %v816 = vpack.c.b16 %v722, %v721
        %v817 = vpack.c.b16 %v724, %v723
        %v818 = vpack.c.b16 %v726, %v725
        %v819 = vpack.c.b16 %v728, %v727
        %v820 = vpack.c.b16 %v730, %v729
        %v821 = vpack.c.b16 %v732, %v731
        %v822 = vpack.c.b16 %v734, %v733
        %v823 = vpack.c.b16 %v736, %v735
        %v824 = vpack.c.b16 %v738, %v737
        %v825 = vpack.c.b16 %v740, %v739
        %v826 = vpack.c.b16 %v742, %v741
        %v827 = vpack.c.b16 %v744, %v743
        %v828 = vpack.c.b16 %v746, %v745
        %v829 = vpack.c.b16 %v748, %v747
        %v830 = vpack.c.b16 %v750, %v749
        %911 = vmatprep.subr.bf16.mxu0 0
        %912 = vmatpush1.bf16.msra.mxu0 %v751
        %913 = vmatprep.subr.bf16.mxu0 0
        %914 = vmatpush1.bf16.msra.mxu0 %v752
        %915 = vmatprep.subr.bf16.mxu0 0
        %916 = vmatpush1.bf16.msra.mxu0 %v753
        %917 = vmatprep.subr.bf16.mxu0 0
        %918 = vmatpush1.bf16.msra.mxu0 %v754
        %919 = vmatprep.subr.bf16.mxu0 0
        %920 = vmatpush1.bf16.msra.mxu0 %v755
        %921 = vmatprep.subr.bf16.mxu0 0
        %922 = vmatpush1.bf16.msra.mxu0 %v756
        %923 = vmatprep.subr.bf16.mxu0 0
        %924 = vmatpush1.bf16.msra.mxu0 %v757
        %925 = vmatprep.subr.bf16.mxu0 0
        %926 = vmatpush1.bf16.msra.mxu0 %v758
        %927 = vmatprep.subr.bf16.mxu0 0
        %928 = vmatpush1.bf16.msra.mxu0 %v759
        %929 = vmatprep.subr.bf16.mxu0 0
        %930 = vmatpush1.bf16.msra.mxu0 %v760
        %931 = vmatprep.subr.bf16.mxu0 0
        %932 = vmatpush1.bf16.msra.mxu0 %v761
        %933 = vmatprep.subr.bf16.mxu0 0
        %934 = vmatpush1.bf16.msra.mxu0 %v762
        %935 = vmatprep.subr.bf16.mxu0 0
        %936 = vmatpush1.bf16.msra.mxu0 %v763
        %937 = vmatprep.subr.bf16.mxu0 0
        %938 = vmatpush1.bf16.msra.mxu0 %v764
        %939 = vmatprep.subr.bf16.mxu0 0
        %940 = vmatpush1.bf16.msra.mxu0 %v765
        %941 = vmatprep.subr.bf16.mxu0 0
        %942 = vmatpush1.bf16.msra.mxu0 %v766
        %943 = vmatprep.mubr.bf16.mxu0 %v412
        %944 = vmatmul.mubr.bf16.gmra.mrb[0].mxu0 %v411
        %v945 = vpop.f32.mrb[0].mxu0
        %v946 = vadd.f32 %v379, %v945
        %v947 = vpop.f32.mrb[0].mxu0
        %v948 = vpop.f32.mrb[0].mxu0
        %v949 = vadd.f32 %v379, %v948
        %v950 = vpop.f32.mrb[0].mxu0
        %951 = vdwg.mxu0
        %952 = vmatprep.subr.bf16.mxu0 0
        %953 = vmatpush1.bf16.msra.mxu0 %v767
        %954 = vmatprep.subr.bf16.mxu0 0
        %955 = vmatpush1.bf16.msra.mxu0 %v768
        %956 = vmatprep.subr.bf16.mxu0 0
        %957 = vmatpush1.bf16.msra.mxu0 %v769
        %958 = vmatprep.subr.bf16.mxu0 0
        %959 = vmatpush1.bf16.msra.mxu0 %v770
        %960 = vmatprep.subr.bf16.mxu0 0
        %961 = vmatpush1.bf16.msra.mxu0 %v771
        %962 = vmatprep.subr.bf16.mxu0 0
        %963 = vmatpush1.bf16.msra.mxu0 %v772
        %964 = vmatprep.subr.bf16.mxu0 0
        %965 = vmatpush1.bf16.msra.mxu0 %v773
        %966 = vmatprep.subr.bf16.mxu0 0
        %967 = vmatpush1.bf16.msra.mxu0 %v774
        %968 = vmatprep.subr.bf16.mxu0 0
        %969 = vmatpush1.bf16.msra.mxu0 %v775
        %970 = vmatprep.subr.bf16.mxu0 0
        %971 = vmatpush1.bf16.msra.mxu0 %v776
        %972 = vmatprep.subr.bf16.mxu0 0
        %973 = vmatpush1.bf16.msra.mxu0 %v777
        %974 = vmatprep.subr.bf16.mxu0 0
        %975 = vmatpush1.bf16.msra.mxu0 %v778
        %976 = vmatprep.subr.bf16.mxu0 0
        %977 = vmatpush1.bf16.msra.mxu0 %v779
        %978 = vmatprep.subr.bf16.mxu0 0
        %979 = vmatpush1.bf16.msra.mxu0 %v780
        %980 = vmatprep.subr.bf16.mxu0 0
        %981 = vmatpush1.bf16.msra.mxu0 %v781
        %982 = vmatprep.subr.bf16.mxu0 0
        %983 = vmatpush1.bf16.msra.mxu0 %v782
        %984 = vmatprep.mubr.bf16.mxu0 %v414
        %985 = vmatmul.mubr.bf16.gmra.mrb[0].mxu0 %v413
        %v986 = vpop.f32.mrb[0].mxu0
        %v987 = vadd.f32 %v946, %v986
        %v988 = vpop.f32.mrb[0].mxu0
        %v989 = vpop.f32.mrb[0].mxu0
        %v990 = vadd.f32 %v949, %v989
        %v991 = vpop.f32.mrb[0].mxu0
        %992 = vdwg.mxu0
        %993 = vmatprep.subr.bf16.mxu0 0
        %994 = vmatpush1.bf16.msra.mxu0 %v783
        %995 = vmatprep.subr.bf16.mxu0 0
        %996 = vmatpush1.bf16.msra.mxu0 %v784
        %997 = vmatprep.subr.bf16.mxu0 0
        %998 = vmatpush1.bf16.msra.mxu0 %v785
        %999 = vmatprep.subr.bf16.mxu0 0
        %1000 = vmatpush1.bf16.msra.mxu0 %v786
        %1001 = vmatprep.subr.bf16.mxu0 0
        %1002 = vmatpush1.bf16.msra.mxu0 %v787
        %1003 = vmatprep.subr.bf16.mxu0 0
        %1004 = vmatpush1.bf16.msra.mxu0 %v788
        %1005 = vmatprep.subr.bf16.mxu0 0
        %1006 = vmatpush1.bf16.msra.mxu0 %v789
        %1007 = vmatprep.subr.bf16.mxu0 0
        %1008 = vmatpush1.bf16.msra.mxu0 %v790
        %1009 = vmatprep.subr.bf16.mxu0 0
        %1010 = vmatpush1.bf16.msra.mxu0 %v791
        %1011 = vmatprep.subr.bf16.mxu0 0
        %1012 = vmatpush1.bf16.msra.mxu0 %v792
        %1013 = vmatprep.subr.bf16.mxu0 0
        %1014 = vmatpush1.bf16.msra.mxu0 %v793
        %1015 = vmatprep.subr.bf16.mxu0 0
        %1016 = vmatpush1.bf16.msra.mxu0 %v794
        %1017 = vmatprep.subr.bf16.mxu0 0
        %1018 = vmatpush1.bf16.msra.mxu0 %v795
        %1019 = vmatprep.subr.bf16.mxu0 0
        %1020 = vmatpush1.bf16.msra.mxu0 %v796
        %1021 = vmatprep.subr.bf16.mxu0 0
        %1022 = vmatpush1.bf16.msra.mxu0 %v797
        %1023 = vmatprep.subr.bf16.mxu0 0
        %1024 = vmatpush1.bf16.msra.mxu0 %v798
        %1025 = vmatprep.mubr.bf16.mxu0 %v416
        %1026 = vmatmul.mubr.bf16.gmra.mrb[0].mxu0 %v415
        %v1027 = vpop.f32.mrb[0].mxu0
        %v1028 = vadd.f32 %v987, %v1027
        %v1029 = vpop.f32.mrb[0].mxu0
        %v1030 = vpop.f32.mrb[0].mxu0
        %v1031 = vadd.f32 %v990, %v1030
        %v1032 = vpop.f32.mrb[0].mxu0
        %1033 = vdwg.mxu0
        %1034 = vmatprep.subr.bf16.mxu0 0
        %1035 = vmatpush1.bf16.msra.mxu0 %v799
        %1036 = vmatprep.subr.bf16.mxu0 0
        %1037 = vmatpush1.bf16.msra.mxu0 %v800
        %1038 = vmatprep.subr.bf16.mxu0 0
        %1039 = vmatpush1.bf16.msra.mxu0 %v801
        %1040 = vmatprep.subr.bf16.mxu0 0
        %1041 = vmatpush1.bf16.msra.mxu0 %v802
        %1042 = vmatprep.subr.bf16.mxu0 0
        %1043 = vmatpush1.bf16.msra.mxu0 %v803
        %1044 = vmatprep.subr.bf16.mxu0 0
        %1045 = vmatpush1.bf16.msra.mxu0 %v804
        %1046 = vmatprep.subr.bf16.mxu0 0
        %1047 = vmatpush1.bf16.msra.mxu0 %v805
        %1048 = vmatprep.subr.bf16.mxu0 0
        %1049 = vmatpush1.bf16.msra.mxu0 %v806
        %1050 = vmatprep.subr.bf16.mxu0 0
        %1051 = vmatpush1.bf16.msra.mxu0 %v807
        %1052 = vmatprep.subr.bf16.mxu0 0
        %1053 = vmatpush1.bf16.msra.mxu0 %v808
        %1054 = vmatprep.subr.bf16.mxu0 0
        %1055 = vmatpush1.bf16.msra.mxu0 %v809
        %1056 = vmatprep.subr.bf16.mxu0 0
        %1057 = vmatpush1.bf16.msra.mxu0 %v810
        %1058 = vmatprep.subr.bf16.mxu0 0
        %1059 = vmatpush1.bf16.msra.mxu0 %v811
        %1060 = vmatprep.subr.bf16.mxu0 0
        %1061 = vmatpush1.bf16.msra.mxu0 %v812
        %1062 = vmatprep.subr.bf16.mxu0 0
        %1063 = vmatpush1.bf16.msra.mxu0 %v813
        %1064 = vmatprep.subr.bf16.mxu0 0
        %1065 = vmatpush1.bf16.msra.mxu0 %v814
        %1066 = vmatprep.mubr.bf16.mxu0 %v418
        %1067 = vmatmul.mubr.bf16.gmra.mrb[0].mxu0 %v417
        %v1068 = vpop.f32.mrb[0].mxu0
        %v1069 = vadd.f32 %v1028, %v1068
        %v1070 = vpop.f32.mrb[0].mxu0
        %v1071 = vpop.f32.mrb[0].mxu0
        %v1072 = vadd.f32 %v1031, %v1071
        %v1073 = vpop.f32.mrb[0].mxu0
        %1074 = vdwg.mxu0
        %1075 = vmatprep.subr.bf16.mxu0 0
        %1076 = vmatpush1.bf16.msra.mxu0 %v815
        %1077 = vmatprep.subr.bf16.mxu0 0
        %1078 = vmatpush1.bf16.msra.mxu0 %v816
        %1079 = vmatprep.subr.bf16.mxu0 0
        %1080 = vmatpush1.bf16.msra.mxu0 %v817
        %1081 = vmatprep.subr.bf16.mxu0 0
        %1082 = vmatpush1.bf16.msra.mxu0 %v818
        %1083 = vmatprep.subr.bf16.mxu0 0
        %1084 = vmatpush1.bf16.msra.mxu0 %v819
        %1085 = vmatprep.subr.bf16.mxu0 0
        %1086 = vmatpush1.bf16.msra.mxu0 %v820
        %1087 = vmatprep.subr.bf16.mxu0 0
        %1088 = vmatpush1.bf16.msra.mxu0 %v821
        %1089 = vmatprep.subr.bf16.mxu0 0
        %1090 = vmatpush1.bf16.msra.mxu0 %v822
        %1091 = vmatprep.subr.bf16.mxu0 0
        %1092 = vmatpush1.bf16.msra.mxu0 %v823
        %1093 = vmatprep.subr.bf16.mxu0 0
        %1094 = vmatpush1.bf16.msra.mxu0 %v824
        %1095 = vmatprep.subr.bf16.mxu0 0
        %1096 = vmatpush1.bf16.msra.mxu0 %v825
        %1097 = vmatprep.subr.bf16.mxu0 0
        %1098 = vmatpush1.bf16.msra.mxu0 %v826
        %1099 = vmatprep.subr.bf16.mxu0 0
        %1100 = vmatpush1.bf16.msra.mxu0 %v827
        %1101 = vmatprep.subr.bf16.mxu0 0
        %1102 = vmatpush1.bf16.msra.mxu0 %v828
        %1103 = vmatprep.subr.bf16.mxu0 0
        %1104 = vmatpush1.bf16.msra.mxu0 %v829
        %1105 = vmatprep.subr.bf16.mxu0 0
        %1106 = vmatpush1.bf16.msra.mxu0 %v830
        %1107 = vmatprep.mubr.bf16.mxu0 %v420
        %1108 = vmatmul.mubr.bf16.gmra.mrb[0].mxu0 %v419
        %v1109 = vpop.f32.mrb[0].mxu0
        %v1110 = vadd.f32 %v1069, %v1109
        %v1111 = vpop.f32.mrb[0].mxu0
        %v1112 = vpop.f32.mrb[0].mxu0
        %v1113 = vadd.f32 %v1072, %v1112
        %v1114 = vpop.f32.mrb[0].mxu0
        %1115 = vdwg.mxu0
        %vm1116 = vcmask 261120
        %1117 = vst.msk [vmem:[%s189] sm:$0xff] %vm1116, %v1110
        %1118 = vst.msk [vmem:[%s189 + $0x8] sm:$0xff] %vm1116, %v1113
        %s1119 = sand.u32 %s103, 1
        %s1120 = scalar_lea.sflag [#allocation3], %s1119
        %s1121 = sand.u32 %s103, 1
        %s1122 = smul.addr %s1121, 16
        %s1123 = scalar_lea.vmem [#allocation2], %s1122
        // Predicated region
        $region33: #{tpu_custom_call.1} parent=31 // pred_check
          %p1124 = pneg %p113
        $region34: #{tpu_custom_call.1} parent=31 // pred_check_branch
          %1126 = sbr.rel (%p1124) target = $region36
        $region35: #{tpu_custom_call.1} parent=31 // pred_region
          %s1128 = ssub.s32 256, 256
          %1129 = vsyncadd %s1120, %s1128
          %s1130 = smul.addr %s17, 2
          %s1131 = smul.addr %s1130, 128
          %s1132 = scalar_lea.hbm %s3, %s1131
          %s1133 = sshll.u32 %s1123, 4
          %s1134 = int_to_ptr.vmem [resolvable:$true] %s1133
          %1139 = dma.vmem_to_hbm [thread:$0]  %s1134, 256, %s1132, %s1120, 128, 128, 8
        $region36: #{tpu_custom_call.1} parent=31 // pred_fallthru
          _
      $region32: #{tpu_custom_call.1} parent=5 // pred_fallthru
        _
      %p1140 = scmp.le.s32.totalorder 2, %s12
      // Predicated region
      $region37: #{tpu_custom_call.1} parent=5 // pred_check
        %p1141 = pneg %p1140
      $region38: #{tpu_custom_call.1} parent=5 // pred_check_branch
        %1143 = sbr.rel (%p1141) target = $region40
      $region39: #{tpu_custom_call.1} parent=5 // pred_region
        %s1144 = ssub.s32 %s12, 2
        // Predicated region
        $region41: #{tpu_custom_call.1} parent=39 // pred_check
          %p1145 = pneg %p119
        $region42: #{tpu_custom_call.1} parent=39 // pred_check_branch
          %1147 = sbr.rel (%p1145) target = $region44
        $region43: #{tpu_custom_call.1} parent=39 // pred_region
          %s1148 = sand.u32 %s104, 1
          %s1149 = scalar_lea.sflag [#allocation3], %s1148
          %s1150 = sand.u32 %s104, 1
          %s1151 = smul.addr %s1150, 16
          %s1152 = scalar_lea.vmem [#allocation2], %s1151
          %1153 = dma.done %s1149, 256
        $region44: #{tpu_custom_call.1} parent=39 // pred_fallthru
          _
      $region40: #{tpu_custom_call.1} parent=5 // pred_fallthru
        _
    $region6: #{tpu_custom_call.1} parent=1 // loop_footer
      %s16 = sadd.s32 1, %s12
    $region7: #{tpu_custom_call.1} parent=1 // loop_footer_branch
      %11 = sbr.rel target = $region3
    $region8: #{tpu_custom_call.1} parent=1 // loop_exit
      _
    %1154 = vsyncpa [#allocation3], 1
    %s1155 = scalar_lea.sflag [#allocation3], 1
    %1156 = vsyncpa %s1155, 1

</llo_original>
